<compile_context>
chip_gen: v5e
topology: v5e:2x2
jax: 0.10.0
libtpu: 0.0.40
codegen_flags: <defaults>
</compile_context>

<pallas_src>
import functools

import jax
import jax.numpy as jnp
from jax.experimental import pallas as pl
from jax.experimental.pallas import tpu as pltpu


def qnet_kernel(x_ref, w1_ref, b1_ref, w2_ref, b2_ref, w3_ref, b3_ref, o_ref):
    # Fused 3-layer MLP on one (TILE_B, n_state) tile of the batch.
    x = x_ref[...]  # keep HBM dtype (f32 or bf16); MXU accumulates in f32.

    h1 = jnp.dot(x, w1_ref[...], preferred_element_type=jnp.float32)
    h1 = jnp.maximum(h1 + b1_ref[...], 0.0)          # f32 epilogue

    h2 = jnp.dot(h1.astype(w2_ref.dtype), w2_ref[...],
                 preferred_element_type=jnp.float32)
    h2 = jnp.maximum(h2 + b2_ref[...], 0.0)

    h3 = jnp.dot(h2.astype(w3_ref.dtype), w3_ref[...],
                 preferred_element_type=jnp.float32)
    # Output slab is a multiple of 128 lanes -> unmasked, lane-dense stores.
    o_ref[...] = (h3 + b3_ref[...]).astype(o_ref.dtype)


@functools.partial(jax.jit, static_argnames=("tile_b",))
def qnet_forward(x, params, *, tile_b=2048):
    """params: w1 (n_state,32), b1 (32,), w2 (32,32), b2 (32,),
    w3 (32,n_action), b3 (n_action,). Weights may be f32 or bf16; biases and
    accumulation are always f32. Returns f32 (batch, n_action)."""
    batch, n_state = x.shape
    n_action = params["w3"].shape[1]
    n_out_pad = pl.cdiv(n_action, 128) * 128          # lane-dense output width

    w_dtype = params["w1"].dtype
    x = x.astype(w_dtype)
    w1 = params["w1"].astype(w_dtype)
    w2 = params["w2"].astype(w_dtype)

    # Biases as (1, N) f32 rows, resident in VMEM for the whole grid.
    b1 = params["b1"].astype(jnp.float32).reshape(1, -1)
    b2 = params["b2"].astype(jnp.float32).reshape(1, -1)

    # Pad layer-3 weight/bias out to n_out_pad columns once (zeros -> sliced off).
    w3p = jnp.zeros((params["w3"].shape[0], n_out_pad), w_dtype)
    w3p = w3p.at[:, :n_action].set(params["w3"].astype(w_dtype))
    b3p = jnp.zeros((1, n_out_pad), jnp.float32)
    b3p = b3p.at[:, :n_action].set(params["b3"].astype(jnp.float32))

    # Batch tiling: single full block for small batches, otherwise pad the
    # batch to a multiple of tile_b so the grid is exact.
    if batch <= tile_b:
        tile = batch
        padded_batch = batch
    else:
        tile = tile_b
        padded_batch = tile_b * pl.cdiv(batch, tile_b)
        if padded_batch != batch:
            x = jnp.pad(x, ((0, padded_batch - batch), (0, 0)))
    grid = (padded_batch // tile,)

    def resident(a):
        # Same block index every grid step -> DMA'd into VMEM once, kept live.
        return pl.BlockSpec(a.shape, lambda i: tuple(0 for _ in a.shape))

    out = pl.pallas_call(
        qnet_kernel,
        out_shape=jax.ShapeDtypeStruct((padded_batch, n_out_pad), jnp.float32),
        grid=grid,
        in_specs=[
            pl.BlockSpec((tile, n_state), lambda i: (i, 0)),   # streamed x tile
            resident(w1), resident(b1),
            resident(w2), resident(b2),
            resident(w3p), resident(b3p),
        ],
        out_specs=pl.BlockSpec((tile, n_out_pad), lambda i: (i, 0)),
        compiler_params=pltpu.CompilerParams(
            dimension_semantics=("parallel",),   # shard batch across TCs (v7x)
            vmem_limit_bytes=64 << 20,
        ),
    )(x, w1, b1, w2, b2, w3p, b3p)

    return out[:batch, :n_action]


def init_qnet_params(key, n_state, n_action):
    # Mimics PyTorch nn.Linear default init: U(-1/sqrt(fan_in), 1/sqrt(fan_in)),
    # stored transposed as [in_features, out_features] so y = x @ W + b.
    ks = jax.random.split(key, 6)

    def linear(kw, kb, fan_in, fan_out):
        bound = 1.0 / jnp.sqrt(jnp.float32(fan_in))
        w = jax.random.uniform(kw, (fan_in, fan_out), jnp.float32, -bound, bound)
        b = jax.random.uniform(kb, (fan_out,), jnp.float32, -bound, bound)
        return w, b

    w1, b1 = linear(ks[0], ks[1], n_state, 32)
    w2, b2 = linear(ks[2], ks[3], 32, 32)
    w3, b3 = linear(ks[4], ks[5], 32, n_action)
    return {"w1": w1, "b1": b1, "w2": w2, "b2": b2, "w3": w3, "b3": b3}


def qnet_reference(x, params):
    h1 = jax.nn.relu(x @ params["w1"] + params["b1"])
    h2 = jax.nn.relu(h1 @ params["w2"] + params["b2"])
    return h2 @ params["w3"] + params["b3"]


if __name__ == "__main__":
    key = jax.random.PRNGKey(0)
    k_param, k_x_small, k_x_big = jax.random.split(key, 3)

    n_state, n_action = 4, 2
    params = init_qnet_params(k_param, n_state, n_action)

    # 1) Small case matching the original module's test shapes (single block).
    x_small = jax.random.normal(k_x_small, (2, n_state), dtype=jnp.float32)
    out_small = qnet_forward(x_small, params)
    jax.block_until_ready(out_small)
    ref_small = qnet_reference(x_small, params)
    assert out_small.shape == (2, n_action)
    assert jnp.allclose(out_small, ref_small, atol=1e-5, rtol=1e-5)

    # 2) Larger batch exercising the tiled, pipelined, parallel grid (f32).
    x_big = jax.random.normal(k_x_big, (4096, n_state), dtype=jnp.float32)
    out_big = qnet_forward(x_big, params, tile_b=2048)
    jax.block_until_ready(out_big)
    ref_big = qnet_reference(x_big, params)
    assert out_big.shape == (4096, n_action)
    assert jnp.allclose(out_big, ref_big, atol=1e-4, rtol=1e-4)

    # 3) bf16-in-HBM path (halved DMA bytes, native MXU bf16), f32 accumulation.
    params_bf16 = {k: (v.astype(jnp.bfloat16) if k.startswith("w") else v)
                   for k, v in params.items()}
    out_bf16 = qnet_forward(x_big, params_bf16, tile_b=2048)
    jax.block_until_ready(out_bf16)
    params_cast = {k: v.astype(jnp.float32) for k, v in params_bf16.items()}
    ref_bf16 = qnet_reference(x_big.astype(jnp.bfloat16).astype(jnp.float32),
                              params_cast)
    assert jnp.allclose(out_bf16, ref_bf16, atol=1e-2, rtol=1e-2)

    print("KERNEL_OK")
</pallas_src>

<mosaic_0001>
module attributes {stable_mosaic.version = 11 : i64} {
  func.func @qnet_kernel(%arg0: i32, %arg1: memref<2x4xf32, #tpu.memory_space<vmem>>, %arg2: memref<4x32xf32, #tpu.memory_space<vmem>>, %arg3: memref<1x32xf32, #tpu.memory_space<vmem>>, %arg4: memref<32x32xf32, #tpu.memory_space<vmem>>, %arg5: memref<1x32xf32, #tpu.memory_space<vmem>>, %arg6: memref<32x128xf32, #tpu.memory_space<vmem>>, %arg7: memref<1x128xf32, #tpu.memory_space<vmem>>, %arg8: memref<2x128xf32, #tpu.memory_space<vmem>>) attributes {dimension_semantics = [#tpu.dimension_semantics<parallel>], iteration_bounds = array<i64: 1>, scalar_prefetch = 0 : i64, scratch_operands = 0 : i64, tpu.core_type = #tpu.core_type<tc>, window_params = [{transform_indices = @transform_0, window_bounds = array<i64: 2, 4>}, {pipeline_mode = #tpu.pipeline_mode<synchronous>, transform_indices = @transform_1, window_bounds = array<i64: 4, 32>}, {pipeline_mode = #tpu.pipeline_mode<synchronous>, transform_indices = @transform_2, window_bounds = array<i64: 1, 32>}, {pipeline_mode = #tpu.pipeline_mode<synchronous>, transform_indices = @transform_3, window_bounds = array<i64: 32, 32>}, {pipeline_mode = #tpu.pipeline_mode<synchronous>, transform_indices = @transform_4, window_bounds = array<i64: 1, 32>}, {pipeline_mode = #tpu.pipeline_mode<synchronous>, transform_indices = @transform_5, window_bounds = array<i64: 32, 128>}, {pipeline_mode = #tpu.pipeline_mode<synchronous>, transform_indices = @transform_6, window_bounds = array<i64: 1, 128>}, {transform_indices = @transform_7, window_bounds = array<i64: 2, 128>}]} {
    %c0 = arith.constant 0 : index
    %c0_0 = arith.constant 0 : index
    %0 = vector.load %arg1[%c0, %c0_0] : memref<2x4xf32, #tpu.memory_space<vmem>>, vector<2x4xf32>
    %c0_1 = arith.constant 0 : index
    %c0_2 = arith.constant 0 : index
    %1 = vector.load %arg2[%c0_1, %c0_2] : memref<4x32xf32, #tpu.memory_space<vmem>>, vector<4x32xf32>
    %cst = arith.constant dense<0.000000e+00> : vector<2x32xf32>
    %2 = tpu.matmul %0, %1, %cst {dimension_numbers = #tpu.dot_dimension_numbers<[1], [0], [0], [1], [0, 0, 1, 1], [], []>} : vector<2x4xf32>, vector<4x32xf32>, vector<2x32xf32> -> vector<2x32xf32>
    %c0_3 = arith.constant 0 : index
    %c0_4 = arith.constant 0 : index
    %3 = vector.load %arg3[%c0_3, %c0_4] : memref<1x32xf32, #tpu.memory_space<vmem>>, vector<1x32xf32>
    %4 = vector.broadcast %3 : vector<1x32xf32> to vector<2x32xf32>
    %5 = arith.addf %2, %4 : vector<2x32xf32>
    %cst_5 = arith.constant 0.000000e+00 : f32
    %6 = vector.broadcast %cst_5 : f32 to vector<2x32xf32>
    %7 = arith.maximumf %5, %6 : vector<2x32xf32>
    %c0_6 = arith.constant 0 : index
    %c0_7 = arith.constant 0 : index
    %8 = vector.load %arg4[%c0_6, %c0_7] : memref<32x32xf32, #tpu.memory_space<vmem>>, vector<32x32xf32>
    %cst_8 = arith.constant dense<0.000000e+00> : vector<2x32xf32>
    %9 = tpu.matmul %7, %8, %cst_8 {dimension_numbers = #tpu.dot_dimension_numbers<[1], [0], [0], [1], [0, 0, 1, 1], [], []>} : vector<2x32xf32>, vector<32x32xf32>, vector<2x32xf32> -> vector<2x32xf32>
    %c0_9 = arith.constant 0 : index
    %c0_10 = arith.constant 0 : index
    %10 = vector.load %arg5[%c0_9, %c0_10] : memref<1x32xf32, #tpu.memory_space<vmem>>, vector<1x32xf32>
    %11 = vector.broadcast %10 : vector<1x32xf32> to vector<2x32xf32>
    %12 = arith.addf %9, %11 : vector<2x32xf32>
    %cst_11 = arith.constant 0.000000e+00 : f32
    %13 = vector.broadcast %cst_11 : f32 to vector<2x32xf32>
    %14 = arith.maximumf %12, %13 : vector<2x32xf32>
    %c0_12 = arith.constant 0 : index
    %c0_13 = arith.constant 0 : index
    %15 = vector.load %arg6[%c0_12, %c0_13] : memref<32x128xf32, #tpu.memory_space<vmem>>, vector<32x128xf32>
    %cst_14 = arith.constant dense<0.000000e+00> : vector<2x128xf32>
    %16 = tpu.matmul %14, %15, %cst_14 {dimension_numbers = #tpu.dot_dimension_numbers<[1], [0], [0], [1], [0, 0, 1, 1], [], []>} : vector<2x32xf32>, vector<32x128xf32>, vector<2x128xf32> -> vector<2x128xf32>
    %c0_15 = arith.constant 0 : index
    %c0_16 = arith.constant 0 : index
    %17 = vector.load %arg7[%c0_15, %c0_16] : memref<1x128xf32, #tpu.memory_space<vmem>>, vector<1x128xf32>
    %18 = vector.broadcast %17 : vector<1x128xf32> to vector<2x128xf32>
    %19 = arith.addf %16, %18 : vector<2x128xf32>
    %c0_17 = arith.constant 0 : index
    %c0_18 = arith.constant 0 : index
    %20 = vector.load %arg8[%c0_17, %c0_18] : memref<2x128xf32, #tpu.memory_space<vmem>>, vector<2x128xf32>
    tpu.vector_store %arg8[%c0_17, %c0_18], %19 {strides = array<i32>} : memref<2x128xf32, #tpu.memory_space<vmem>>, vector<2x128xf32>,
    return
  }
  func.func @transform_0(%arg0: i32) -> (i32, i32) {
    %c0_i32 = arith.constant 0 : i32
    %c0_i32_0 = arith.constant 0 : i32
    return %arg0, %c0_i32 : i32, i32
  }
  func.func @transform_1(%arg0: i32) -> (i32, i32) {
    %c0_i32 = arith.constant 0 : i32
    %c0_i32_0 = arith.constant 0 : i32
    %c0_i32_1 = arith.constant 0 : i32
    return %c0_i32, %c0_i32_0 : i32, i32
  }
  func.func @transform_2(%arg0: i32) -> (i32, i32) {
    %c0_i32 = arith.constant 0 : i32
    %c0_i32_0 = arith.constant 0 : i32
    %c0_i32_1 = arith.constant 0 : i32
    return %c0_i32, %c0_i32_0 : i32, i32
  }
  func.func @transform_3(%arg0: i32) -> (i32, i32) {
    %c0_i32 = arith.constant 0 : i32
    %c0_i32_0 = arith.constant 0 : i32
    %c0_i32_1 = arith.constant 0 : i32
    return %c0_i32, %c0_i32_0 : i32, i32
  }
  func.func @transform_4(%arg0: i32) -> (i32, i32) {
    %c0_i32 = arith.constant 0 : i32
    %c0_i32_0 = arith.constant 0 : i32
    %c0_i32_1 = arith.constant 0 : i32
    return %c0_i32, %c0_i32_0 : i32, i32
  }
  func.func @transform_5(%arg0: i32) -> (i32, i32) {
    %c0_i32 = arith.constant 0 : i32
    %c0_i32_0 = arith.constant 0 : i32
    %c0_i32_1 = arith.constant 0 : i32
    return %c0_i32, %c0_i32_0 : i32, i32
  }
  func.func @transform_6(%arg0: i32) -> (i32, i32) {
    %c0_i32 = arith.constant 0 : i32
    %c0_i32_0 = arith.constant 0 : i32
    %c0_i32_1 = arith.constant 0 : i32
    return %c0_i32, %c0_i32_0 : i32, i32
  }
  func.func @transform_7(%arg0: i32) -> (i32, i32) {
    %c0_i32 = arith.constant 0 : i32
    %c0_i32_0 = arith.constant 0 : i32
    return %arg0, %c0_i32 : i32, i32
  }
}

</mosaic_0001>

<llo_original>
// kernel: qnet_forward.1
$region0: #{qnet_forward.1}
  #allocation0 [shape = 'u32[]', space=smem, size = 0x4, offset = 0x4, fixed_abs, tag = 'smem constant byte address 0x4 - core index']
  #allocation1 [shape = 'u32[72,128]{1,0:T(1,128)}', space=vmem, size = 0x9000, scoped, tag = 'internal scratch']
  %s0 = inlined_call_operand.vmem [shape: f32[2,4], index: 0, kind: input, shape index: {}]
  %s1 = inlined_call_operand.vmem [shape: f32[4,32], index: 1, kind: input, shape index: {}]
  %s2 = inlined_call_operand.vmem [shape: f32[1,32], index: 2, kind: input, shape index: {}]
  %s3 = inlined_call_operand.vmem [shape: f32[32,32], index: 3, kind: input, shape index: {}]
  %s4 = inlined_call_operand.vmem [shape: f32[1,32], index: 4, kind: input, shape index: {}]
  %s5 = inlined_call_operand.vmem [shape: f32[32,128], index: 5, kind: input, shape index: {}]
  %s6 = inlined_call_operand.vmem [shape: f32[1,128], index: 6, kind: input, shape index: {}]
  %s7 = inlined_call_operand.hbm [shape: f32[2,128], index: 7, kind: output, shape index: {}]
  %s8 = sld [smem:[#allocation0]]
  $region38: #{qnet_forward.1} parent=0
    _
  %s10 = ssub.s32 1, %s8
  %s11 = scalar_select 0, %s10, %s8
  $region1: #{qnet_forward.1} parent=0
    #allocation2 [shape = 'u8[1024]{0}', space=vmem, size = 0x400, scoped, tag = 'output window, operand 0, single buffered']
    #allocation3 [shape = 's32[1]{0}', space=sflag, size = 0x4, scoped, tag = 'scoped memory for qnet_forward.1']
    %12 = vsyncpa [#allocation3], 0
    // Predicated region
    $region2: #{qnet_forward.1} parent=1 // pred_check
      _
    $region3: #{qnet_forward.1} parent=1 // pred_check_branch
      %14 = sbr.rel (0) target = $region5
    $region4: #{qnet_forward.1} parent=1 // pred_region
      _
    $region5: #{qnet_forward.1} parent=1 // pred_fallthru
      _
    // Predicated region
    $region6: #{qnet_forward.1} parent=1 // pred_check
      _
    $region7: #{qnet_forward.1} parent=1 // pred_check_branch
      %16 = sbr.rel (0) target = $region9
    $region8: #{qnet_forward.1} parent=1 // pred_region
      _
    $region9: #{qnet_forward.1} parent=1 // pred_fallthru
      _
    // Predicated region
    $region10: #{qnet_forward.1} parent=1 // pred_check
      _
    $region11: #{qnet_forward.1} parent=1 // pred_check_branch
      %18 = sbr.rel (0) target = $region13
    $region12: #{qnet_forward.1} parent=1 // pred_region
      _
    $region13: #{qnet_forward.1} parent=1 // pred_fallthru
      _
    // Predicated region
    $region14: #{qnet_forward.1} parent=1 // pred_check
      _
    $region15: #{qnet_forward.1} parent=1 // pred_check_branch
      %20 = sbr.rel (0) target = $region17
    $region16: #{qnet_forward.1} parent=1 // pred_region
      _
    $region17: #{qnet_forward.1} parent=1 // pred_fallthru
      _
    // Predicated region
    $region18: #{qnet_forward.1} parent=1 // pred_check
      _
    $region19: #{qnet_forward.1} parent=1 // pred_check_branch
      %22 = sbr.rel (0) target = $region21
    $region20: #{qnet_forward.1} parent=1 // pred_region
      _
    $region21: #{qnet_forward.1} parent=1 // pred_fallthru
      _
    // Predicated region
    $region22: #{qnet_forward.1} parent=1 // pred_check
      _
    $region23: #{qnet_forward.1} parent=1 // pred_check_branch
      %24 = sbr.rel (0) target = $region25
    $region24: #{qnet_forward.1} parent=1 // pred_region
      _
    $region25: #{qnet_forward.1} parent=1 // pred_fallthru
      _
    // Predicated region
    $region26: #{qnet_forward.1} parent=1 // pred_check
      _
    $region27: #{qnet_forward.1} parent=1 // pred_check_branch
      %26 = sbr.rel (0) target = $region29
    $region28: #{qnet_forward.1} parent=1 // pred_region
      _
    $region29: #{qnet_forward.1} parent=1 // pred_fallthru
      _
    %v27 = vld [vmem:[%s0] sm:$0x3]
    %v28 = vld [vmem:[%s1] sm:$0xf]
    %v29 = vld [vmem:[%s2] sm:$0x1]
    %v31 = vperm.slane %v29, 0
    %vm33 = vcmask 31744
    %v35 = vsel %vm33, %v27, 0
    %vm37 = vcmask 1043456
    %v39 = vsel %vm37, %v28, 0
    %41 = vmatpush.msra.mxu0 0.0
    %42 = vmatpush.msra.mxu0 0.0
    %43 = vmatpush.msra.mxu0 0.0
    %44 = vmatpush.msra.mxu0 0.0
    %45 = vmatpush.msra.mxu0 0.0
    %46 = vmatpush.msra.mxu0 0.0
    %47 = vmatpush.msra.mxu0 0.0
    %48 = vmatpush.msra.mxu0 0.0
    %49 = vmatpush.msra.mxu0 0.0
    %50 = vmatpush.msra.mxu0 0.0
    %51 = vmatpush.msra.mxu0 0.0
    %52 = vmatpush.msra.mxu0 0.0
    %53 = vmatpush.msra.mxu0 0.0
    %54 = vmatpush.msra.mxu0 0.0
    %55 = vmatpush.msra.mxu0 0.0
    %56 = vmatpush.msra.mxu0 %v39
    %57 = vmatmul.f32.gmra.mxu0 %v35
    %v58 = vpop.f32.mrf.mxu0
    %v59 = vadd.f32 %v31, %v58
    %60 = vdwg.mxu0
    %v61 = vmax.f32 %v59, 0.0
    %v62 = vld [vmem:[%s3] sm:$0xff]
    %v63 = vld [vmem:[%s3 + $0x8] sm:$0xff]
    %v64 = vld [vmem:[%s3 + $0x10] sm:$0xff]
    %v65 = vld [vmem:[%s3 + $0x18] sm:$0xff]
    %v66 = vld [vmem:[%s4] sm:$0x1]
    %v68 = vperm.slane %v66, 0
    %vm70 = vcmask 261120
    %v72 = vsel %vm70, %v61, 0
    %74 = vmatpush.msra.mxu0 0.0
    %75 = vmatpush.msra.mxu0 0.0
    %76 = vmatpush.msra.mxu0 0.0
    %77 = vmatpush.msra.mxu0 0.0
    %78 = vmatpush.msra.mxu0 0.0
    %79 = vmatpush.msra.mxu0 0.0
    %80 = vmatpush.msra.mxu0 0.0
    %81 = vmatpush.msra.mxu0 0.0
    %82 = vmatpush.msra.mxu0 0.0
    %83 = vmatpush.msra.mxu0 0.0
    %84 = vmatpush.msra.mxu0 0.0
    %85 = vmatpush.msra.mxu0 0.0
    %86 = vmatpush.msra.mxu0 %v65
    %87 = vmatpush.msra.mxu0 %v64
    %88 = vmatpush.msra.mxu0 %v63
    %89 = vmatpush.msra.mxu0 %v62
    %90 = vmatmul.f32.gmra.mxu0 %v72
    %v91 = vpop.f32.mrf.mxu0
    %v92 = vadd.f32 %v68, %v91
    %93 = vdwg.mxu0
    %v94 = vmax.f32 %v92, 0.0
    %v95 = vld [vmem:[%s5] sm:$0xff]
    %v96 = vld [vmem:[%s5 + $0x8] sm:$0xff]
    %v97 = vld [vmem:[%s5 + $0x10] sm:$0xff]
    %v98 = vld [vmem:[%s5 + $0x18] sm:$0xff]
    %v99 = vld [vmem:[%s6] sm:$0x1]
    %v101 = vperm.slane %v99, 0
    %v104 = vsel %vm70, %v94, 0
    %106 = vmatpush.msra.mxu0 0.0
    %107 = vmatpush.msra.mxu0 0.0
    %108 = vmatpush.msra.mxu0 0.0
    %109 = vmatpush.msra.mxu0 0.0
    %110 = vmatpush.msra.mxu0 0.0
    %111 = vmatpush.msra.mxu0 0.0
    %112 = vmatpush.msra.mxu0 0.0
    %113 = vmatpush.msra.mxu0 0.0
    %114 = vmatpush.msra.mxu0 0.0
    %115 = vmatpush.msra.mxu0 0.0
    %116 = vmatpush.msra.mxu0 0.0
    %117 = vmatpush.msra.mxu0 0.0
    %118 = vmatpush.msra.mxu0 %v98
    %119 = vmatpush.msra.mxu0 %v97
    %120 = vmatpush.msra.mxu0 %v96
    %121 = vmatpush.msra.mxu0 %v95
    %122 = vmatmul.f32.gmra.mxu0 %v104
    %v123 = vpop.f32.mrf.mxu0
    %v124 = vadd.f32 %v101, %v123
    %125 = vdwg.mxu0
    %126 = vst [vmem:[#allocation2] sm:$0x3] %v124
    // Predicated region
    $region30: #{qnet_forward.1} parent=1 // pred_check
      _
    $region31: #{qnet_forward.1} parent=1 // pred_check_branch
      %128 = sbr.rel (0) target = $region33
    $region32: #{qnet_forward.1} parent=1 // pred_region
      %130 = vsyncadd [#allocation3], 0
      %s132 = sshll.u32 [#allocation2], 4
      %s133 = int_to_ptr.vmem [resolvable:$true] %s132
      %s134 = sshll.u32 %s7, 4
      %s135 = int_to_ptr.hbm [resolvable:$true] %s134
      %137 = dma.vmem_to_hbm [thread:$0]  %s133, 32, %s135, [#allocation3]
    $region33: #{qnet_forward.1} parent=1 // pred_fallthru
      _
    // Predicated region
    $region34: #{qnet_forward.1} parent=1 // pred_check
      _
    $region35: #{qnet_forward.1} parent=1 // pred_check_branch
      %139 = sbr.rel (0) target = $region37
    $region36: #{qnet_forward.1} parent=1 // pred_region
      %141 = dma.done [#allocation3], 32
    $region37: #{qnet_forward.1} parent=1 // pred_fallthru
      _
    %142 = vsyncpa [#allocation3], 1

</llo_original>
